<compile_context>
chip_gen: v7x
topology: tpu7x:2x2x1
jax: 0.10.0
libtpu: 0.0.40
codegen_flags: <defaults>
</compile_context>

<pallas_src>
import jax
import jax.numpy as jnp
from jax.experimental import pallas as pl
from jax.experimental.pallas import tpu as pltpu


# ----------------------------- Pallas kernel -------------------------------
def neumf_kernel(u_ref, it_ref, w1it_ref, w2f_ref, bias_ref, out_ref):
    """Scores one user against a tile of `tn` items.

    u_ref    : (1, D, 2) f32   per-user pack: [..., 0] = u_gmf * (W_gmf @ wf_g)
                                              [..., 1] = u_mlp @ W1[:D] + b1
    it_ref   : (2D, tn)  bf16  fused, transposed item block
                               rows [0, D)  = GMF item embedding (items on lanes)
                               rows [D, 2D) = MLP item embedding (items on lanes)
    w1it_ref : (D, D)    bf16  W1[D:, :].T  (item half of MLP layer 1)
    w2f_ref  : (D, 1)    f32   W2 @ wf_mlp  (layer 2 folded into final linear)
    bias_ref : (1, 1)    f32   b_gmf @ wf_gmf + b2 @ wf_mlp + bf
    out_ref  : (1, tn)   f32   logits for this (user, item-tile), lane-dense
    """
    D = w1it_ref.shape[0]
    it = it_ref[...]                                   # (2D, tn) bf16
    u = u_ref[0]                                       # (D, 2) f32
    uw, u_l1 = u[:, 0:1], u[:, 1:2]                    # (D, 1) columns

    # MLP layer 1, item half: the single MXU matmul of the step, f32 accum.
    i_part = jnp.dot(w1it_ref[...], it[D:, :],
                     preferred_element_type=jnp.float32)          # (D, tn)
    h = jnp.maximum(i_part + u_l1, 0.0)                           # (D, tn)
    # TODO(synk): nn.Dropout is identity in eval mode; not modeled here.

    # GMF branch (pure f32 VPU) + layer-2/final (folded into w2f): a single
    # sublane-axis reduction lands the result as a lane-dense (1, tn) row.
    gmf = it[:D, :].astype(jnp.float32) * uw                      # (D, tn)
    out_ref[...] = (jnp.sum(h * w2f_ref[...] + gmf, axis=0, keepdims=True)
                    + bias_ref[0, 0])


# ------------------------------- wrapper ------------------------------------
def _round_up(x, m):
    return (x + m - 1) // m * m


def neumf_forward(params, users, items, *, items_block=2048,
                  stream_dtype=jnp.bfloat16):
    """users: (B,) int32, items: (B, N) int32 -> logits (B, N) float32."""
    B = users.shape[0]
    N = items.shape[1]
    D = params["emb_user_gmf"].shape[1]
    H = D // 2
    hp = jax.lax.Precision.HIGHEST

    # Item tile on the lane axis: multiple of 128, clamped to round_up(N, 128)
    # so padding never exceeds one lane tile.  Production default tn = 2048.
    tn = _round_up(min(items_block, _round_up(N, 128)), 128)
    Np = _round_up(N, tn)
    Jb = Np // tn                          # item tiles per user
    Mp = B * Np

    if Np != N:                            # pad with item id 0; sliced off below
        items = jnp.pad(items, ((0, 0), (0, Np - N)))

    # ---- glue: ONE fused item gather -> transposed bf16 stream --------------
    item_tab = jnp.concatenate(
        [params["emb_item_gmf"], params["emb_item_mlp"]],
        axis=1).astype(stream_dtype)                               # (n_items, 2D)
    it_t = jnp.take(item_tab, items.reshape(-1), axis=0).T         # (2D, Mp)

    # ---- glue: per-user precompute (hoisted out of the kernel) --------------
    u_gmf = jnp.take(params["emb_user_gmf"], users, axis=0)        # (B, D) f32
    u_mlp = jnp.take(params["emb_user_mlp"], users, axis=0)        # (B, D) f32
    wf_g = params["wf"][:H, :]                                     # (H, 1)
    wf_m = params["wf"][H:, :]                                     # (H, 1)
    wg_f = jnp.dot(params["w_gmf"], wf_g, precision=hp).reshape(1, D)
    uw = u_gmf * wg_f                                              # (B, D)
    u_l1 = jnp.dot(u_mlp, params["w1"][:D, :], precision=hp) + params["b1"]
    u_pack = jnp.stack([uw, u_l1], axis=-1)                        # (B, D, 2) f32

    # ---- glue: shared weights (final Linear folded into both branches) ------
    w1it = params["w1"][D:, :].T.astype(stream_dtype)              # (D, D)
    w2f = jnp.dot(params["w2"], wf_m, precision=hp).reshape(D, 1)  # (D, 1)
    bias_f = (jnp.dot(params["b_gmf"], wf_g, precision=hp)
              + jnp.dot(params["b2"], wf_m, precision=hp)
              + params["bf"]).reshape(1, 1)                        # (1, 1)

    out = pl.pallas_call(
        neumf_kernel,
        out_shape=jax.ShapeDtypeStruct((1, Mp), jnp.float32),
        grid_spec=pltpu.PrefetchScalarGridSpec(
            num_scalar_prefetch=0,
            grid=(B, Jb),
            in_specs=[
                pl.BlockSpec((1, D, 2), lambda b, j: (b, 0, 0)),        # user pack
                pl.BlockSpec((2 * D, tn), lambda b, j: (0, b * Jb + j)),  # items
                pl.BlockSpec((D, D), lambda b, j: (0, 0)),              # W1 item^T
                pl.BlockSpec((D, 1), lambda b, j: (0, 0)),              # W2@wf
                pl.BlockSpec((1, 1), lambda b, j: (0, 0)),              # fused bias
            ],
            out_specs=pl.BlockSpec((1, tn), lambda b, j: (0, b * Jb + j)),
        ),
        # VMEM per step is tiny (one (2D, tn) bf16 stream + a few (D, tn) f32
        # temporaries); no vmem_limit_bytes needed even on v7x for tn <= 8192.
        compiler_params=pltpu.CompilerParams(
            dimension_semantics=("parallel", "parallel")),
    )(u_pack, it_t, w1it, w2f, bias_f)

    return out.reshape(B, Np)[:, :N]


# --------------------------- parameter init ---------------------------------
def xavier_uniform(key, in_dim, out_dim):
    # matches nn.init.xavier_uniform_ on a torch (out, in) weight; stored in
    # the transposed (in, out) layout used for x @ W.
    limit = jnp.sqrt(6.0 / (in_dim + out_dim))
    return jax.random.uniform(key, (in_dim, out_dim), jnp.float32,
                              minval=-limit, maxval=limit)


def init_params(key, n_users, n_items, D):
    H = D // 2
    ks = jax.random.split(key, 12)
    return {
        "emb_user_gmf": 0.01 * jax.random.normal(ks[0], (n_users, D), jnp.float32),
        "emb_item_gmf": 0.01 * jax.random.normal(ks[1], (n_items, D), jnp.float32),
        "emb_user_mlp": 0.01 * jax.random.normal(ks[2], (n_users, D), jnp.float32),
        "emb_item_mlp": 0.01 * jax.random.normal(ks[3], (n_items, D), jnp.float32),
        "w_gmf": xavier_uniform(ks[4], D, H),
        "w1": xavier_uniform(ks[5], 2 * D, D),
        "w2": xavier_uniform(ks[6], D, H),
        "wf": xavier_uniform(ks[7], 2 * H, 1),
        # The PyTorch module zero-inits biases; use small random values here so
        # the (folded) bias paths are actually exercised by the check.
        "b_gmf": 0.01 * jax.random.normal(ks[8], (H,), jnp.float32),
        "b1": 0.01 * jax.random.normal(ks[9], (D,), jnp.float32),
        "b2": 0.01 * jax.random.normal(ks[10], (H,), jnp.float32),
        "bf": 0.01 * jax.random.normal(ks[11], (1,), jnp.float32),
    }


# ------------------------------ reference -----------------------------------
def neumf_ref(params, users, items, *, quantize_streams=False):
    """Pure-JAX mirror of NeuMF._forward (eval mode).

    quantize_streams=True applies the same bf16 rounding that the kernel path
    uses (item embeddings + the item half of W1; user path stays f32),
    isolating kernel arithmetic for the tight check."""
    hp = jax.lax.Precision.HIGHEST
    q = ((lambda x: x.astype(jnp.bfloat16).astype(jnp.float32))
         if quantize_streams else (lambda x: x))
    B, N = items.shape
    D = params["emb_user_gmf"].shape[1]
    u_gmf = jnp.take(params["emb_user_gmf"], users, axis=0)[:, None, :]
    i_gmf = q(jnp.take(params["emb_item_gmf"], items, axis=0))
    out_gmf = (jnp.dot((u_gmf * i_gmf).reshape(-1, D), params["w_gmf"],
                       precision=hp) + params["b_gmf"])
    u_mlp = jnp.broadcast_to(
        jnp.take(params["emb_user_mlp"], users, axis=0)[:, None, :], (B, N, D))
    i_mlp = q(jnp.take(params["emb_item_mlp"], items, axis=0))
    w1 = jnp.concatenate([params["w1"][:D, :], q(params["w1"][D:, :])], axis=0)
    x = jnp.concatenate([u_mlp, i_mlp], axis=2).reshape(-1, 2 * D)
    h = jnp.maximum(jnp.dot(x, w1, precision=hp) + params["b1"], 0.0)
    out_mlp = jnp.dot(h, params["w2"], precision=hp) + params["b2"]
    out = (jnp.dot(jnp.concatenate([out_gmf, out_mlp], axis=1), params["wf"],
                   precision=hp) + params["bf"])
    return out.reshape(B, N)


def _check(out, params, users, items):
    # Tight check against a reference with identical bf16 item/W1 rounding.
    ref_q = neumf_ref(params, users, items, quantize_streams=True)
    assert jnp.allclose(out, ref_q, atol=1e-5, rtol=1e-3), \
        float(jnp.max(jnp.abs(out - ref_q)))
    # Looser check against the full-f32 module math (bf16 item-stream
    # quantization is the only semantic difference).
    ref = neumf_ref(params, users, items, quantize_streams=False)
    assert jnp.allclose(out, ref, atol=5e-3, rtol=5e-2), \
        float(jnp.max(jnp.abs(out - ref)))


# --------------------------------- main --------------------------------------
if __name__ == "__main__":
    key = jax.random.PRNGKey(0)
    n_users, n_items, D = 10, 64, 32
    pkey, ukey, ikey, ukey2, ikey2 = jax.random.split(key, 5)
    params = init_params(pkey, n_users, n_items, D)

    # Config 1: N not a lane-tile multiple -> exercises padding (Jb == 1).
    B, N = 2, 40
    users = jax.random.randint(ukey, (B,), 0, n_users, dtype=jnp.int32)
    items = jax.random.randint(ikey, (B, N), 0, n_items, dtype=jnp.int32)
    out = jax.block_until_ready(neumf_forward(params, users, items))
    assert out.shape == (B, N)
    _check(out, params, users, items)

    # Config 2: several item tiles per user (Jb > 1) with a small items_block.
    B2, N2 = 2, 300
    users2 = jax.random.randint(ukey2, (B2,), 0, n_users, dtype=jnp.int32)
    items2 = jax.random.randint(ikey2, (B2, N2), 0, n_items, dtype=jnp.int32)
    out2 = jax.block_until_ready(
        neumf_forward(params, users2, items2, items_block=128))
    assert out2.shape == (B2, N2)
    _check(out2, params, users2, items2)

    print("KERNEL_OK")
</pallas_src>

<mosaic_0001>
module attributes {stable_mosaic.version = 11 : i64} {
  func.func @neumf_kernel(%arg0: i32, %arg1: i32, %arg2: memref<1x32x2xf32, #tpu.memory_space<vmem>>, %arg3: memref<64x128xbf16, #tpu.memory_space<vmem>>, %arg4: memref<32x32xbf16, #tpu.memory_space<vmem>>, %arg5: memref<32x1xf32, #tpu.memory_space<vmem>>, %arg6: memref<1x1xf32, #tpu.memory_space<vmem>>, %arg7: memref<1x128xf32, #tpu.memory_space<vmem>>) attributes {dimension_semantics = [#tpu.dimension_semantics<parallel>, #tpu.dimension_semantics<parallel>], iteration_bounds = array<i64: 2, 1>, scalar_prefetch = 0 : i64, scratch_operands = 0 : i64, tpu.core_type = #tpu.core_type<tc>, window_params = [{transform_indices = @transform_0, window_bounds = array<i64: 1, 32, 2>}, {transform_indices = @transform_1, window_bounds = array<i64: 64, 128>}, {pipeline_mode = #tpu.pipeline_mode<synchronous>, transform_indices = @transform_2, window_bounds = array<i64: 32, 32>}, {pipeline_mode = #tpu.pipeline_mode<synchronous>, transform_indices = @transform_3, window_bounds = array<i64: 32, 1>}, {pipeline_mode = #tpu.pipeline_mode<synchronous>, transform_indices = @transform_4, window_bounds = array<i64: 1, 1>}, {transform_indices = @transform_5, window_bounds = array<i64: 1, 128>}]} {
    %c0 = arith.constant 0 : index
    %c0_0 = arith.constant 0 : index
    %0 = vector.load %arg3[%c0, %c0_0] : memref<64x128xbf16, #tpu.memory_space<vmem>>, vector<64x128xbf16>
    %c0_1 = arith.constant 0 : index
    %c0_2 = arith.constant 0 : index
    %c0_3 = arith.constant 0 : index
    %1 = vector.load %arg2[%c0_1, %c0_2, %c0_3] : memref<1x32x2xf32, #tpu.memory_space<vmem>>, vector<1x32x2xf32>
    %2 = vector.shape_cast %1 : vector<1x32x2xf32> to vector<32x2xf32>
    %3 = vector.extract_strided_slice %2 {offsets = [0, 0], sizes = [32, 1], strides = [1, 1]} : vector<32x2xf32> to vector<32x1xf32>
    %4 = vector.extract_strided_slice %2 {offsets = [0, 1], sizes = [32, 1], strides = [1, 1]} : vector<32x2xf32> to vector<32x1xf32>
    %c0_4 = arith.constant 0 : index
    %c0_5 = arith.constant 0 : index
    %5 = vector.load %arg4[%c0_4, %c0_5] : memref<32x32xbf16, #tpu.memory_space<vmem>>, vector<32x32xbf16>
    %6 = vector.extract_strided_slice %0 {offsets = [32, 0], sizes = [32, 128], strides = [1, 1]} : vector<64x128xbf16> to vector<32x128xbf16>
    %cst = arith.constant dense<0.000000e+00> : vector<32x128xf32>
    %7 = tpu.matmul %5, %6, %cst {dimension_numbers = #tpu.dot_dimension_numbers<[1], [0], [0], [1], [0, 0, 1, 1], [], []>} : vector<32x32xbf16>, vector<32x128xbf16>, vector<32x128xf32> -> vector<32x128xf32>
    %8 = vector.broadcast %4 : vector<32x1xf32> to vector<32x128xf32>
    %9 = arith.addf %7, %8 : vector<32x128xf32>
    %cst_6 = arith.constant 0.000000e+00 : f32
    %10 = vector.broadcast %cst_6 : f32 to vector<32x128xf32>
    %11 = arith.maximumf %9, %10 : vector<32x128xf32>
    %12 = vector.extract_strided_slice %0 {offsets = [0, 0], sizes = [32, 128], strides = [1, 1]} : vector<64x128xbf16> to vector<32x128xbf16>
    %13 = arith.extf %12 : vector<32x128xbf16> to vector<32x128xf32>
    %14 = vector.broadcast %3 : vector<32x1xf32> to vector<32x128xf32>
    %15 = arith.mulf %13, %14 : vector<32x128xf32>
    %c0_7 = arith.constant 0 : index
    %c0_8 = arith.constant 0 : index
    %16 = vector.load %arg5[%c0_7, %c0_8] : memref<32x1xf32, #tpu.memory_space<vmem>>, vector<32x1xf32>
    %17 = vector.broadcast %16 : vector<32x1xf32> to vector<32x128xf32>
    %18 = arith.mulf %11, %17 : vector<32x128xf32>
    %19 = arith.addf %18, %15 : vector<32x128xf32>
    %cst_9 = arith.constant dense<0.000000e+00> : vector<128xf32>
    %20 = vector.multi_reduction <add>, %19, %cst_9 [0] : vector<32x128xf32> to vector<128xf32>
    %21 = vector.shape_cast %20 : vector<128xf32> to vector<1x128xf32>
    %c0_10 = arith.constant 0 : index
    %c0_11 = arith.constant 0 : index
    %22 = vector.load %arg6[%c0_10, %c0_11] : memref<1x1xf32, #tpu.memory_space<vmem>>, vector<1x1xf32>
    %23 = vector.extract %22[0, 0] : f32 from vector<1x1xf32>
    %24 = vector.broadcast %23 : f32 to vector<1x128xf32>
    %25 = arith.addf %21, %24 : vector<1x128xf32>
    %c0_12 = arith.constant 0 : index
    %c0_13 = arith.constant 0 : index
    %26 = vector.load %arg7[%c0_12, %c0_13] : memref<1x128xf32, #tpu.memory_space<vmem>>, vector<1x128xf32>
    tpu.vector_store %arg7[%c0_12, %c0_13], %25 {strides = array<i32>} : memref<1x128xf32, #tpu.memory_space<vmem>>, vector<1x128xf32>,
    return
  }
  func.func @transform_0(%arg0: i32, %arg1: i32) -> (i32, i32, i32) {
    %c0_i32 = arith.constant 0 : i32
    %c0_i32_0 = arith.constant 0 : i32
    %c0_i32_1 = arith.constant 0 : i32
    return %arg0, %c0_i32, %c0_i32_0 : i32, i32, i32
  }
  func.func @transform_1(%arg0: i32, %arg1: i32) -> (i32, i32) {
    %c1_i32 = arith.constant 1 : i32
    %0 = arith.muli %arg0, %c1_i32 : i32
    %1 = arith.addi %0, %arg1 : i32
    %c0_i32 = arith.constant 0 : i32
    %c0_i32_0 = arith.constant 0 : i32
    return %c0_i32, %1 : i32, i32
  }
  func.func @transform_2(%arg0: i32, %arg1: i32) -> (i32, i32) {
    %c0_i32 = arith.constant 0 : i32
    %c0_i32_0 = arith.constant 0 : i32
    %c0_i32_1 = arith.constant 0 : i32
    return %c0_i32, %c0_i32_0 : i32, i32
  }
  func.func @transform_3(%arg0: i32, %arg1: i32) -> (i32, i32) {
    %c0_i32 = arith.constant 0 : i32
    %c0_i32_0 = arith.constant 0 : i32
    %c0_i32_1 = arith.constant 0 : i32
    return %c0_i32, %c0_i32_0 : i32, i32
  }
  func.func @transform_4(%arg0: i32, %arg1: i32) -> (i32, i32) {
    %c0_i32 = arith.constant 0 : i32
    %c0_i32_0 = arith.constant 0 : i32
    %c0_i32_1 = arith.constant 0 : i32
    return %c0_i32, %c0_i32_0 : i32, i32
  }
  func.func @transform_5(%arg0: i32, %arg1: i32) -> (i32, i32) {
    %c1_i32 = arith.constant 1 : i32
    %0 = arith.muli %arg0, %c1_i32 : i32
    %1 = arith.addi %0, %arg1 : i32
    %c0_i32 = arith.constant 0 : i32
    %c0_i32_0 = arith.constant 0 : i32
    return %c0_i32, %1 : i32, i32
  }
}

</mosaic_0001>

<llo_original>
// kernel: tpu_custom_call.1
$region0: #{tpu_custom_call.1}
  #allocation0 [shape = 'u32[]', space=smem, size = 0x4, offset = 0x4, fixed_abs, tag = 'smem constant byte address 0x4 - core index']
  #allocation1 [shape = 'u32[144,128]{1,0:T(1,128)}', space=vmem, size = 0x12000, scoped, tag = 'internal scratch']
  #allocation2 [shape = 'f32[1,1]{1,0:T(1,128)S(1)}', space=vmem, size = 0x200, scoped, tag = 'scoped memory for tpu_custom_call.1']
  %s0 = inlined_call_operand.vmem [shape: f32[2,32,2], index: 0, kind: input, shape index: {}]
  %s1 = inlined_call_operand.vmem [shape: bf16[64,256], index: 1, kind: input, shape index: {}]
  %s2 = inlined_call_operand.vmem [shape: bf16[32,32], index: 2, kind: input, shape index: {}]
  %s3 = inlined_call_operand.vmem [shape: f32[32,1], index: 3, kind: input, shape index: {}]
  %s4 = inlined_call_operand.<no memory space> [shape: f32[1,1], index: 4, kind: input, shape index: {}]
  %s5 = inlined_call_operand.hbm [shape: f32[1,256], index: 5, kind: output, shape index: {}]
  %s6 = sld [smem:[#allocation0]]
  $region94: #{tpu_custom_call.1} parent=0
    _
  %s8 = ssub.s32 1, %s6
  %s9 = scalar_select 0, %s8, %s6
  %v10 = vstv %s4
  %11 = vst [vmem:[#allocation2] sm:$0x1] %v10
  $region1: #{tpu_custom_call.1} parent=0
    #allocation3 [shape = 'u8[32768]{0}', space=vmem, size = 0x8000, scoped, tag = 'input window, operand 1']
    #allocation4 [shape = 'u8[1024]{0}', space=vmem, size = 0x400, scoped, tag = 'output window, operand 0']
    #allocation5 [shape = 's32[2]{0}', space=sflag, size = 0x8, scoped, tag = 'scoped memory for tpu_custom_call.1']
    %12 = vsyncpa [#allocation5], 0
    %s13 = scalar_lea.sflag [#allocation5], 1
    %14 = vsyncpa %s13, 0
    loop: start=0, step=1, limit=4
    $region2: #{tpu_custom_call.1} parent=1 // loop_pre_header
      _
    $region3: #{tpu_custom_call.1} parent=1 // loop_header
      %s16 = sphi 0, %s20
      %p17 = scmp.ge.s32.totalorder %s16, 4
      %s23 = sphi 0, %s35
      %s24 = sphi 0, %s31
      %s25 = sphi 0, %s23
      %s26 = sphi 0, %s24
      %s27 = sphi 0, %s25
      %s28 = sphi 0, %s26
      %s38 = sphi 0, %s40
      %s41 = sphi 0, %s38
      %s42 = sphi 0, %s41
      %s58 = sphi 0, %s42
      %s66 = sphi 0, %s68
      %s69 = sphi 0, %s66
      %s70 = sphi 0, %s69
      %s86 = sphi 0, %s70
      %s90 = sphi 0, %s90
      %s92 = sphi 0, %s90
      %s93 = sphi 0, %s92
      %s107 = sphi 0, %s93
      %s111 = sphi 0, %s111
      %s113 = sphi 0, %s111
      %s114 = sphi 0, %s113
      %s128 = sphi 0, %s114
      %s132 = sphi 0, %s132
      %s134 = sphi 0, %s132
      %s135 = sphi 0, %s134
      %s149 = sphi 0, %s135
      %s157 = sphi 0, %s159
      %s160 = sphi 0, %s157
      %s161 = sphi 0, %s160
      %s177 = sphi 0, %s161
    $region4: #{tpu_custom_call.1} parent=1 // loop_header_branch
      %19 = sbr.rel (%p17) target = $region8
    $region5: #{tpu_custom_call.1} parent=1 // loop_body
      %s21 = ssub.s32 %s16, 1
      %s22 = ssub.s32 %s16, 2
      %s29 = sadd.s32 1, %s24
      %p30 = scmp.ge.s32.totalorder %s29, 1
      %s31 = scalar_select %p30, 0, %s29
      %s32 = sadd.s32 1, %s23
      %s33 = scalar_select %p30, %s32, %s23
      %p34 = scmp.ge.s32.totalorder %s33, 2
      %s35 = scalar_select %p34, 0, %s33
      %s36 = ssub.s32 %s23, %s35
      %p37 = scmp.eq.s32.totalorder %s36, 0
      %s39 = sadd.s32 %s38, 1
      %s40 = scalar_select %p37, %s38, %s39
      %p43 = pneg %p37
      %p44 = scmp.eq.s32.totalorder %s16, 1
      %p45 = por %p43, %p44
      %p46 = scmp.ne.s32.totalorder %s38, %s41
      %p47 = scmp.eq.s32.totalorder %s16, 0
      %p48 = por %p46, %p47
      %p49 = scmp.ne.s32.totalorder %s38, %s41
      %p50 = scmp.eq.s32.totalorder %s21, 1
      %p51 = por %p49, %p50
      %p52 = scmp.ne.s32.totalorder %s41, %s42
      %p53 = scmp.eq.s32.totalorder %s21, 0
      %p54 = por %p52, %p53
      %p55 = scmp.ne.s32.totalorder %s41, %s42
      %p56 = scmp.eq.s32.totalorder %s22, 1
      %p57 = por %p55, %p56
      %p59 = scmp.ne.s32.totalorder %s42, %s58
      %p60 = scmp.eq.s32.totalorder %s22, 0
      %p61 = por %p59, %p60
      %s62 = sadd.s32 %s23, %s24
      %s63 = sadd.s32 %s35, %s31
      %s64 = ssub.s32 %s62, %s63
      %p65 = scmp.eq.s32.totalorder %s64, 0
      %s67 = sadd.s32 %s66, 1
      %s68 = scalar_select %p65, %s66, %s67
      %p71 = pneg %p65
      %p72 = scmp.eq.s32.totalorder %s16, 1
      %p73 = por %p71, %p72
      %p74 = scmp.ne.s32.totalorder %s66, %s69
      %p75 = scmp.eq.s32.totalorder %s16, 0
      %p76 = por %p74, %p75
      %p77 = scmp.ne.s32.totalorder %s66, %s69
      %p78 = scmp.eq.s32.totalorder %s21, 1
      %p79 = por %p77, %p78
      %p80 = scmp.ne.s32.totalorder %s69, %s70
      %p81 = scmp.eq.s32.totalorder %s21, 0
      %p82 = por %p80, %p81
      %p83 = scmp.ne.s32.totalorder %s69, %s70
      %p84 = scmp.eq.s32.totalorder %s22, 1
      %p85 = por %p83, %p84
      %p87 = scmp.ne.s32.totalorder %s70, %s86
      %p88 = scmp.eq.s32.totalorder %s22, 0
      %p89 = por %p87, %p88
      %s91 = sadd.s32 %s90, 1
      %p94 = scmp.eq.s32.totalorder %s16, 1
      %p95 = scmp.ne.s32.totalorder %s90, %s92
      %p96 = scmp.eq.s32.totalorder %s16, 0
      %p97 = por %p95, %p96
      %p98 = scmp.ne.s32.totalorder %s90, %s92
      %p99 = scmp.eq.s32.totalorder %s21, 1
      %p100 = por %p98, %p99
      %p101 = scmp.ne.s32.totalorder %s92, %s93
      %p102 = scmp.eq.s32.totalorder %s21, 0
      %p103 = por %p101, %p102
      %p104 = scmp.ne.s32.totalorder %s92, %s93
      %p105 = scmp.eq.s32.totalorder %s22, 1
      %p106 = por %p104, %p105
      %p108 = scmp.ne.s32.totalorder %s93, %s107
      %p109 = scmp.eq.s32.totalorder %s22, 0
      %p110 = por %p108, %p109
      %s112 = sadd.s32 %s111, 1
      %p115 = scmp.eq.s32.totalorder %s16, 1
      %p116 = scmp.ne.s32.totalorder %s111, %s113
      %p117 = scmp.eq.s32.totalorder %s16, 0
      %p118 = por %p116, %p117
      %p119 = scmp.ne.s32.totalorder %s111, %s113
      %p120 = scmp.eq.s32.totalorder %s21, 1
      %p121 = por %p119, %p120
      %p122 = scmp.ne.s32.totalorder %s113, %s114
      %p123 = scmp.eq.s32.totalorder %s21, 0
      %p124 = por %p122, %p123
      %p125 = scmp.ne.s32.totalorder %s113, %s114
      %p126 = scmp.eq.s32.totalorder %s22, 1
      %p127 = por %p125, %p126
      %p129 = scmp.ne.s32.totalorder %s114, %s128
      %p130 = scmp.eq.s32.totalorder %s22, 0
      %p131 = por %p129, %p130
      %s133 = sadd.s32 %s132, 1
      %p136 = scmp.eq.s32.totalorder %s16, 1
      %p137 = scmp.ne.s32.totalorder %s132, %s134
      %p138 = scmp.eq.s32.totalorder %s16, 0
      %p139 = por %p137, %p138
      %p140 = scmp.ne.s32.totalorder %s132, %s134
      %p141 = scmp.eq.s32.totalorder %s21, 1
      %p142 = por %p140, %p141
      %p143 = scmp.ne.s32.totalorder %s134, %s135
      %p144 = scmp.eq.s32.totalorder %s21, 0
      %p145 = por %p143, %p144
      %p146 = scmp.ne.s32.totalorder %s134, %s135
      %p147 = scmp.eq.s32.totalorder %s22, 1
      %p148 = por %p146, %p147
      %p150 = scmp.ne.s32.totalorder %s135, %s149
      %p151 = scmp.eq.s32.totalorder %s22, 0
      %p152 = por %p150, %p151
      %s153 = sadd.s32 %s23, %s24
      %s154 = sadd.s32 %s35, %s31
      %s155 = ssub.s32 %s153, %s154
      %p156 = scmp.eq.s32.totalorder %s155, 0
      %s158 = sadd.s32 %s157, 1
      %s159 = scalar_select %p156, %s157, %s158
      %p162 = pneg %p156
      %p163 = scmp.eq.s32.totalorder %s16, 1
      %p164 = por %p162, %p163
      %p165 = scmp.ne.s32.totalorder %s157, %s160
      %p166 = scmp.eq.s32.totalorder %s16, 0
      %p167 = por %p165, %p166
      %p168 = scmp.ne.s32.totalorder %s157, %s160
      %p169 = scmp.eq.s32.totalorder %s21, 1
      %p170 = por %p168, %p169
      %p171 = scmp.ne.s32.totalorder %s160, %s161
      %p172 = scmp.eq.s32.totalorder %s21, 0
      %p173 = por %p171, %p172
      %p174 = scmp.ne.s32.totalorder %s160, %s161
      %p175 = scmp.eq.s32.totalorder %s22, 1
      %p176 = por %p174, %p175
      %p178 = scmp.ne.s32.totalorder %s161, %s177
      %p179 = scmp.eq.s32.totalorder %s22, 0
      %p180 = por %p178, %p179
      %p181 = scmp.le.s32.totalorder 1, %s16
      %p182 = scmp.lt.s32.totalorder %s16, 3
      %p183 = pnand %p181, %p182
      %p184 = pneg %p183
      // Predicated region
      $region9: #{tpu_custom_call.1} parent=5 // pred_check
        _
      $region10: #{tpu_custom_call.1} parent=5 // pred_check_branch
        %186 = sbr.rel (%p183) target = $region12
      $region11: #{tpu_custom_call.1} parent=5 // pred_region
        %s187 = ssub.s32 %s16, 1
        // Predicated region
        $region13: #{tpu_custom_call.1} parent=11 // pred_check
          %p188 = pneg %p103
        $region14: #{tpu_custom_call.1} parent=11 // pred_check_branch
          %190 = sbr.rel (%p188) target = $region16
        $region15: #{tpu_custom_call.1} parent=11 // pred_region
          _
        $region16: #{tpu_custom_call.1} parent=11 // pred_fallthru
          _
        // Predicated region
        $region17: #{tpu_custom_call.1} parent=11 // pred_check
          %p191 = pneg %p124
        $region18: #{tpu_custom_call.1} parent=11 // pred_check_branch
          %193 = sbr.rel (%p191) target = $region20
        $region19: #{tpu_custom_call.1} parent=11 // pred_region
          _
        $region20: #{tpu_custom_call.1} parent=11 // pred_fallthru
          _
        // Predicated region
        $region21: #{tpu_custom_call.1} parent=11 // pred_check
          %p194 = pneg %p145
        $region22: #{tpu_custom_call.1} parent=11 // pred_check_branch
          %196 = sbr.rel (%p194) target = $region24
        $region23: #{tpu_custom_call.1} parent=11 // pred_region
          _
        $region24: #{tpu_custom_call.1} parent=11 // pred_fallthru
          _
      $region12: #{tpu_custom_call.1} parent=5 // pred_fallthru
        _
      %p197 = scmp.lt.s32.totalorder %s16, 2
      // Predicated region
      $region25: #{tpu_custom_call.1} parent=5 // pred_check
        %p198 = pneg %p197
      $region26: #{tpu_custom_call.1} parent=5 // pred_check_branch
        %200 = sbr.rel (%p198) target = $region28
      $region27: #{tpu_custom_call.1} parent=5 // pred_region
        // Predicated region
        $region29: #{tpu_custom_call.1} parent=27 // pred_check
          %p201 = pneg %p48
        $region30: #{tpu_custom_call.1} parent=27 // pred_check_branch
          %203 = sbr.rel (%p201) target = $region32
        $region31: #{tpu_custom_call.1} parent=27 // pred_region
          %p204 = scmp.lt.s32.totalorder %s23, 1
          %s205 = scalar_select %p204, %s23, 1
          %s206 = smul.addr %s205, 4
          %s207 = smul.addr %s206, 8
          %s208 = scalar_lea.vmem %s0, %s207
        $region32: #{tpu_custom_call.1} parent=27 // pred_fallthru
          _
        // Predicated region
        $region33: #{tpu_custom_call.1} parent=27 // pred_check
          %p209 = pneg %p76
        $region34: #{tpu_custom_call.1} parent=27 // pred_check_branch
          %211 = sbr.rel (%p209) target = $region36
        $region35: #{tpu_custom_call.1} parent=27 // pred_region
          %s212 = sand.u32 %s66, 1
          %s213 = sand.u32 %s66, 1
          %s214 = smul.addr %s213, 32
          %s215 = scalar_lea.vmem [#allocation3], %s214
          %s216 = sadd.s32 %s23, %s24
          %s217 = smul.addr %s216, 4
          %s218 = scalar_lea.vmem %s1, %s217
          // Predicated region
          $region37: #{tpu_custom_call.1} parent=35 // pred_check
            _
          $region38: #{tpu_custom_call.1} parent=35 // pred_check_branch
            %220 = sbr.rel (0) target = $region40
          $region39: #{tpu_custom_call.1} parent=35 // pred_region
            // Predicated region
            $region41: #{tpu_custom_call.1} parent=39 // pred_check
              _
            $region42: #{tpu_custom_call.1} parent=39 // pred_check_branch
              %222 = sbr.rel target = $region44
            $region43: #{tpu_custom_call.1} parent=39 // pred_region
              // Predicated region
              $region56: #{tpu_custom_call.1} parent=43 // pred_check
                _
              $region57: #{tpu_custom_call.1} parent=43 // pred_check_branch
                %251 = sbr.rel (0) target = $region59
              $region58: #{tpu_custom_call.1} parent=43 // pred_region
                loop: start=0, step=1, limit=1
                $region60: #{tpu_custom_call.1} parent=58 // loop_pre_header
                  _
                $region61: #{tpu_custom_call.1} parent=58 // loop_header
                  %s253 = sphi 0, %s257
                  %p254 = scmp.ge.s32.totalorder %s253, 1
                  %s258 = sphi %s218, %s218
                  %s259 = sphi %s215, %s215
                $region62: #{tpu_custom_call.1} parent=58 // loop_header_branch
                  %256 = sbr.rel (%p254) target = $region66
                $region63: #{tpu_custom_call.1} parent=58 // loop_body
                  _
                $region64: #{tpu_custom_call.1} parent=58 // loop_footer
                  %s257 = sadd.s32 1, %s253
                $region65: #{tpu_custom_call.1} parent=58 // loop_footer_branch
                  %252 = sbr.rel target = $region61
                $region66: #{tpu_custom_call.1} parent=58 // loop_exit
                  _
                loop: start=0, step=1, limit=1
                $region67: #{tpu_custom_call.1} parent=58 // loop_pre_header
                  _
                $region68: #{tpu_custom_call.1} parent=58 // loop_header
                  %s262 = sphi 0, %s266
                  %p263 = scmp.ge.s32.totalorder %s262, 1
                  %s267 = sphi %s218, %s218
                  %s268 = sphi %s215, %s215
                $region69: #{tpu_custom_call.1} parent=58 // loop_header_branch
                  %265 = sbr.rel (%p263) target = $region73
                $region70: #{tpu_custom_call.1} parent=58 // loop_body
                  %v269 = vld [vmem:[%s267] sm:$0xf]
                  %270 = vst [vmem:[%s268] sm:$0xf] %v269
                  %v271 = vld [vmem:[%s267 + $0x8] sm:$0xf]
                  %272 = vst [vmem:[%s268 + $0x4] sm:$0xf] %v271
                  %v273 = vld [vmem:[%s267 + $0x10] sm:$0xf]
                  %274 = vst [vmem:[%s268 + $0x8] sm:$0xf] %v273
                  %v275 = vld [vmem:[%s267 + $0x18] sm:$0xf]
                  %276 = vst [vmem:[%s268 + $0xc] sm:$0xf] %v275
                  %v277 = vld [vmem:[%s267 + $0x20] sm:$0xf]
                  %278 = vst [vmem:[%s268 + $0x10] sm:$0xf] %v277
                  %v279 = vld [vmem:[%s267 + $0x28] sm:$0xf]
                  %280 = vst [vmem:[%s268 + $0x14] sm:$0xf] %v279
                  %v281 = vld [vmem:[%s267 + $0x30] sm:$0xf]
                  %282 = vst [vmem:[%s268 + $0x18] sm:$0xf] %v281
                  %v283 = vld [vmem:[%s267 + $0x38] sm:$0xf]
                  %284 = vst [vmem:[%s268 + $0x1c] sm:$0xf] %v283
                $region71: #{tpu_custom_call.1} parent=58 // loop_footer
                  %s266 = sadd.s32 1, %s262
                $region72: #{tpu_custom_call.1} parent=58 // loop_footer_branch
                  %261 = sbr.rel target = $region68
                $region73: #{tpu_custom_call.1} parent=58 // loop_exit
                  _
              $region59: #{tpu_custom_call.1} parent=43 // pred_fallthru
                _
            $region44: #{tpu_custom_call.1} parent=39 // pred_fallthru
              _
            // Predicated region
            $region45: #{tpu_custom_call.1} parent=39 // pred_check
              _
            $region46: #{tpu_custom_call.1} parent=39 // pred_check_branch
              %224 = sbr.rel (0) target = $region48
            $region47: #{tpu_custom_call.1} parent=39 // pred_region
              loop: start=0, step=1, limit=1
              $region49: #{tpu_custom_call.1} parent=47 // loop_pre_header
                _
              $region50: #{tpu_custom_call.1} parent=47 // loop_header
                %s227 = sphi 0, %s231
                %p228 = scmp.ge.s32.totalorder %s227, 1
                %s232 = sphi %s218, %s218
                %s233 = sphi %s215, %s215
              $region51: #{tpu_custom_call.1} parent=47 // loop_header_branch
                %230 = sbr.rel (%p228) target = $region55
              $region52: #{tpu_custom_call.1} parent=47 // loop_body
                %v234 = vld [vmem:[%s232] sm:$0xf]
                %235 = vst [vmem:[%s233] sm:$0xf] %v234
                %v236 = vld [vmem:[%s232 + $0x8] sm:$0xf]
                %237 = vst [vmem:[%s233 + $0x4] sm:$0xf] %v236
                %v238 = vld [vmem:[%s232 + $0x10] sm:$0xf]
                %239 = vst [vmem:[%s233 + $0x8] sm:$0xf] %v238
                %v240 = vld [vmem:[%s232 + $0x18] sm:$0xf]
                %241 = vst [vmem:[%s233 + $0xc] sm:$0xf] %v240
                %v242 = vld [vmem:[%s232 + $0x20] sm:$0xf]
                %243 = vst [vmem:[%s233 + $0x10] sm:$0xf] %v242
                %v244 = vld [vmem:[%s232 + $0x28] sm:$0xf]
                %245 = vst [vmem:[%s233 + $0x14] sm:$0xf] %v244
                %v246 = vld [vmem:[%s232 + $0x30] sm:$0xf]
                %247 = vst [vmem:[%s233 + $0x18] sm:$0xf] %v246
                %v248 = vld [vmem:[%s232 + $0x38] sm:$0xf]
                %249 = vst [vmem:[%s233 + $0x1c] sm:$0xf] %v248
              $region53: #{tpu_custom_call.1} parent=47 // loop_footer
                %s231 = sadd.s32 1, %s227
              $region54: #{tpu_custom_call.1} parent=47 // loop_footer_branch
                %226 = sbr.rel target = $region50
              $region55: #{tpu_custom_call.1} parent=47 // loop_exit
                _
            $region48: #{tpu_custom_call.1} parent=39 // pred_fallthru
              _
          $region40: #{tpu_custom_call.1} parent=35 // pred_fallthru
            _
          %285 = vnop
        $region36: #{tpu_custom_call.1} parent=27 // pred_fallthru
          _
      $region28: #{tpu_custom_call.1} parent=5 // pred_fallthru
        _
      %p286 = scmp.le.s32.totalorder 1, %s16
      %p287 = scmp.lt.s32.totalorder %s16, 3
      %p288 = pnand %p286, %p287
      %p289 = pneg %p288
      // Predicated region
      $region74: #{tpu_custom_call.1} parent=5 // pred_check
        _
      $region75: #{tpu_custom_call.1} parent=5 // pred_check_branch
        %291 = sbr.rel (%p288) target = $region77
      $region76: #{tpu_custom_call.1} parent=5 // pred_region
        %s292 = ssub.s32 %s16, 1
        %s293 = sand.u32 %s69, 1
        %s294 = sand.u32 %s69, 1
        %s295 = smul.addr %s294, 32
        %s296 = scalar_lea.vmem [#allocation3], %s295
        // Predicated region
        $region78: #{tpu_custom_call.1} parent=76 // pred_check
          %p297 = pneg %p82
        $region79: #{tpu_custom_call.1} parent=76 // pred_check_branch
          %299 = sbr.rel (%p297) target = $region81
        $region80: #{tpu_custom_call.1} parent=76 // pred_region
          _
        $region81: #{tpu_custom_call.1} parent=76 // pred_fallthru
          _
        %p300 = scmp.lt.s32.totalorder %s25, 1
        %s301 = scalar_select %p300, %s25, 1
        %s302 = smul.addr %s301, 4
        %s303 = smul.addr %s302, 8
        %s304 = scalar_lea.vmem %s0, %s303
        %p305 = pneg %p54
        %p306 = pneg %p51
        %s307 = sand.u32 %s69, 1
        %s308 = sand.u32 %s69, 1
        %s309 = smul.addr %s308, 32
        %s310 = scalar_lea.vmem [#allocation3], %s309
        %p311 = pneg %p82
        %p312 = pneg %p79
        %p313 = pneg %p103
        %p314 = pneg %p100
        %p315 = pneg %p124
        %p316 = pneg %p121
        %p317 = pneg %p145
        %p318 = pneg %p142
        %p319 = pneg %p173
        %p320 = pneg %p170
        %s321 = sand.u32 %s160, 1
        %s322 = scalar_lea.sflag [#allocation5], %s321
        %s323 = sand.u32 %s160, 1
        %s324 = scalar_lea.vmem [#allocation4], %s323
        %p325 = scmp.lt.s32.totalorder %s25, 1
        %s326 = scalar_select %p325, %s25, 1
        %s327 = smul.addr %s326, 4
        %s328 = smul.addr %s327, 8
        %s329 = scalar_lea.vmem %s0, %s328
        %s330 = sadd.s32 %s25, %s26
        %s331 = sadd.s32 %s25, %s26
        %v333 = vld [vmem:[%s296] sm:$0xf]
        %v334 = vld [vmem:[%s296 + $0x4] sm:$0xf]
        %v335 = vld [vmem:[%s296 + $0x8] sm:$0xf]
        %v336 = vld [vmem:[%s296 + $0xc] sm:$0xf]
        %v337 = vld [vmem:[%s296 + $0x10] sm:$0xf]
        %v338 = vld [vmem:[%s296 + $0x14] sm:$0xf]
        %v339 = vld [vmem:[%s296 + $0x18] sm:$0xf]
        %v340 = vld [vmem:[%s296 + $0x1c] sm:$0xf]
        %v341 = vld [vmem:[%s329] sm:$0xff]
        %v342 = vld [vmem:[%s329 + $0x8] sm:$0xff]
        %v343 = vld [vmem:[%s329 + $0x10] sm:$0xff]
        %v344 = vld [vmem:[%s329 + $0x18] sm:$0xff]
        %v345 = vld [vmem:[%s2] sm:$0xf]
        %v346 = vld [vmem:[%s2 + $0x4] sm:$0xf]
        %v347 = vld [vmem:[%s2 + $0x8] sm:$0xf]
        %v348 = vld [vmem:[%s2 + $0xc] sm:$0xf]
        %350 = vset.pattern.permute.xlu0 1
        %351 = vperm.xlu0 %350, %v341
        %v352 = vpop.permute.xlu0 %351
        %355 = vset.pattern.permute.xlu0 1
        %356 = vperm.xlu0 %355, %v342
        %v357 = vpop.permute.xlu0 %356
        %360 = vset.pattern.permute.xlu0 1
        %361 = vperm.xlu0 %360, %v343
        %v362 = vpop.permute.xlu0 %361
        %365 = vset.pattern.permute.xlu0 1
        %366 = vperm.xlu0 %365, %v344
        %v367 = vpop.permute.xlu0 %366
        %v373 = vunpack.c.l.b16 %v345
        %v374 = vunpack.c.l.b16 %v346
        %v375 = vunpack.c.l.b16 %v347
        %v376 = vunpack.c.l.b16 %v348
        %v377 = vpack.c.b16 %v374, %v373
        %v378 = vpack.c.b16 %v376, %v375
        %v383 = vunpack.c.l.b16 %v337
        %v384 = vunpack.c.l.b16 %v338
        %v385 = vunpack.c.l.b16 %v339
        %v386 = vunpack.c.l.b16 %v340
        %v387 = vpack.c.b16 %v384, %v383
        %v388 = vpack.c.b16 %v386, %v385
        %vm391 = vcmask 261120
        %v393 = vsel %vm391, %v377, 0
        %v396 = vsel %vm391, %v378, 0
        %398 = vmatprep.subr.bf16.mxu0 0
        %399 = vmatpush1.bf16.msra.mxu0 %v387
        %400 = vmatprep.subr.bf16.mxu0 0
        %401 = vmatpush1.bf16.msra.mxu0 %v388
        %402 = vmatprep.subr.bf16.mxu0 0
        %403 = vmatpush1.bf16.msra.mxu0 0
        %404 = vmatprep.subr.bf16.mxu0 0
        %405 = vmatpush1.bf16.msra.mxu0 0
        %406 = vmatprep.subr.bf16.mxu0 0
        %407 = vmatpush1.bf16.msra.mxu0 0
        %408 = vmatprep.subr.bf16.mxu0 0
        %409 = vmatpush1.bf16.msra.mxu0 0
        %410 = vmatprep.subr.bf16.mxu0 0
        %411 = vmatpush1.bf16.msra.mxu0 0
        %412 = vmatprep.subr.bf16.mxu0 0
        %413 = vmatpush1.bf16.msra.mxu0 0
        %414 = vmatprep.subr.bf16.mxu0 0
        %415 = vmatpush1.bf16.msra.mxu0 0
        %416 = vmatprep.subr.bf16.mxu0 0
        %417 = vmatpush1.bf16.msra.mxu0 0
        %418 = vmatprep.subr.bf16.mxu0 0
        %419 = vmatpush1.bf16.msra.mxu0 0
        %420 = vmatprep.subr.bf16.mxu0 0
        %421 = vmatpush1.bf16.msra.mxu0 0
        %422 = vmatprep.subr.bf16.mxu0 0
        %423 = vmatpush1.bf16.msra.mxu0 0
        %424 = vmatprep.subr.bf16.mxu0 0
        %425 = vmatpush1.bf16.msra.mxu0 0
        %426 = vmatprep.subr.bf16.mxu0 0
        %427 = vmatpush1.bf16.msra.mxu0 0
        %428 = vmatprep.subr.bf16.mxu0 0
        %429 = vmatpush1.bf16.msra.mxu0 0
        %430 = vmatprep.mubr.bf16.mxu0 0
        %431 = vmatmul.mubr.bf16.gmra.mrb[0].mxu0 %v393
        %v432 = vpop.f32.mrb[0].mxu0
        %v433 = vadd.f32 %v352, %v432
        %v434 = vpop.f32.mrb[0].mxu0
        %v435 = vpop.f32.mrb[0].mxu0
        %v436 = vadd.f32 %v357, %v435
        %v437 = vpop.f32.mrb[0].mxu0
        %438 = vmatprep.mubr.bf16.mxu0 0
        %439 = vmatmul.mubr.bf16.gmra.mrb[0].mxu0 %v396
        %v440 = vpop.f32.mrb[0].mxu0
        %v441 = vadd.f32 %v362, %v440
        %v442 = vpop.f32.mrb[0].mxu0
        %v443 = vpop.f32.mrb[0].mxu0
        %v444 = vadd.f32 %v367, %v443
        %v445 = vpop.f32.mrb[0].mxu0
        %446 = vdwg.mxu0
        %v447 = vmax.f32 %v433, 0.0
        %v448 = vmax.f32 %v436, 0.0
        %v449 = vmax.f32 %v441, 0.0
        %v450 = vmax.f32 %v444, 0.0
        %v451 = vunpack.c.l.bf16 %v333
        %v452 = vunpack.c.l.bf16 %v334
        %v453 = vunpack.c.l.bf16 %v335
        %v454 = vunpack.c.l.bf16 %v336
        %455 = vset.pattern.permute.xlu0 0
        %456 = vperm.xlu0 %455, %v341
        %v457 = vpop.permute.xlu0 %456
        %459 = vset.pattern.permute.xlu0 0
        %460 = vperm.xlu0 %459, %v342
        %v461 = vpop.permute.xlu0 %460
        %463 = vset.pattern.permute.xlu0 0
        %464 = vperm.xlu0 %463, %v343
        %v465 = vpop.permute.xlu0 %464
        %467 = vset.pattern.permute.xlu0 0
        %468 = vperm.xlu0 %467, %v344
        %v469 = vpop.permute.xlu0 %468
        %v471 = vmul.f32 %v451, %v457
        %v472 = vmul.f32 %v452, %v461
        %v473 = vmul.f32 %v453, %v465
        %v474 = vmul.f32 %v454, %v469
        %v475 = vld [vmem:[%s3] sm:$0xff]
        %v476 = vld [vmem:[%s3 + $0x8] sm:$0xff]
        %v477 = vld [vmem:[%s3 + $0x10] sm:$0xff]
        %v478 = vld [vmem:[%s3 + $0x18] sm:$0xff]
        %480 = vset.pattern.permute.xlu0 0
        %481 = vperm.xlu0 %480, %v475
        %v482 = vpop.permute.xlu0 %481
        %485 = vset.pattern.permute.xlu0 0
        %486 = vperm.xlu0 %485, %v476
        %v487 = vpop.permute.xlu0 %486
        %490 = vset.pattern.permute.xlu0 0
        %491 = vperm.xlu0 %490, %v477
        %v492 = vpop.permute.xlu0 %491
        %495 = vset.pattern.permute.xlu0 0
        %496 = vperm.xlu0 %495, %v478
        %v497 = vpop.permute.xlu0 %496
        %v499 = vmul.f32 %v447, %v482
        %v500 = vmul.f32 %v448, %v487
        %v501 = vmul.f32 %v449, %v492
        %v502 = vmul.f32 %v450, %v497
        %v503 = vadd.f32 %v499, %v471
        %v504 = vadd.f32 %v500, %v472
        %v505 = vadd.f32 %v501, %v473
        %v506 = vadd.f32 %v502, %v474
        %v507 = vadd.f32 %v503, %v504
        %v508 = vadd.f32 %v507, %v505
        %v509 = vadd.f32 %v508, %v506
        %v510 = vrot.slane %v509, 4
        %v511 = vadd.f32 %v509, %v510
        %v512 = vrot.slane %v511, 2
        %v513 = vadd.f32 %v511, %v512
        %v514 = vrot.slane %v513, 1
        %v515 = vadd.f32 %v513, %v514
        %v516 = vld [vmem:[#allocation2] sm:$0x1]
        %s517 = vtos %v516
        %v518 = vstv %s517
        %v519 = vadd.f32 %v515, %v518
        %520 = vst [vmem:[%s324] sm:$0x1] %v519
        %s521 = sand.u32 %s160, 1
        %s522 = scalar_lea.sflag [#allocation5], %s521
        %s523 = sand.u32 %s160, 1
        %s524 = scalar_lea.vmem [#allocation4], %s523
        // Predicated region
        $region82: #{tpu_custom_call.1} parent=76 // pred_check
          %p525 = pneg %p170
        $region83: #{tpu_custom_call.1} parent=76 // pred_check_branch
          %527 = sbr.rel (%p525) target = $region85
        $region84: #{tpu_custom_call.1} parent=76 // pred_region
          %s528 = sadd.s32 %s25, %s26
          %s530 = ssub.s32 16, 16
          %531 = vsyncadd %s522, %s530
          %s532 = smul.addr %s528, 16
          %s533 = scalar_lea.hbm %s5, %s532
          %s535 = sshll.u32 %s524, 4
          %s536 = int_to_ptr.vmem [resolvable:$true] %s535
          %538 = dma.vmem_to_hbm [thread:$0]  %s536, 16, %s533, %s522
        $region85: #{tpu_custom_call.1} parent=76 // pred_fallthru
          _
      $region77: #{tpu_custom_call.1} parent=5 // pred_fallthru
        _
      %p539 = scmp.le.s32.totalorder 2, %s16
      // Predicated region
      $region86: #{tpu_custom_call.1} parent=5 // pred_check
        %p540 = pneg %p539
      $region87: #{tpu_custom_call.1} parent=5 // pred_check_branch
        %542 = sbr.rel (%p540) target = $region89
      $region88: #{tpu_custom_call.1} parent=5 // pred_region
        %s543 = ssub.s32 %s16, 2
        // Predicated region
        $region90: #{tpu_custom_call.1} parent=88 // pred_check
          %p544 = pneg %p176
        $region91: #{tpu_custom_call.1} parent=88 // pred_check_branch
          %546 = sbr.rel (%p544) target = $region93
        $region92: #{tpu_custom_call.1} parent=88 // pred_region
          %s547 = sand.u32 %s161, 1
          %s548 = scalar_lea.sflag [#allocation5], %s547
          %s549 = sand.u32 %s161, 1
          %s550 = scalar_lea.vmem [#allocation4], %s549
          %551 = dma.done %s548, 16
        $region93: #{tpu_custom_call.1} parent=88 // pred_fallthru
          _
      $region89: #{tpu_custom_call.1} parent=5 // pred_fallthru
        _
    $region6: #{tpu_custom_call.1} parent=1 // loop_footer
      %s20 = sadd.s32 1, %s16
    $region7: #{tpu_custom_call.1} parent=1 // loop_footer_branch
      %15 = sbr.rel target = $region3
    $region8: #{tpu_custom_call.1} parent=1 // loop_exit
      _
    %552 = vsyncpa [#allocation5], 1
    %s553 = scalar_lea.sflag [#allocation5], 1
    %554 = vsyncpa %s553, 1

</llo_original>
